<compile_context>
chip_gen: v7x
topology: tpu7x:2x2x1
jax: 0.10.0
libtpu: 0.0.40
codegen_flags: <defaults>
</compile_context>

<pallas_src>
import functools

import jax
import jax.numpy as jnp
from jax.experimental import pallas as pl
from jax.experimental.pallas import tpu as pltpu

LANE = 128
VMEM_LIMIT_BYTES = 32 * 1024 * 1024   # >= scoped default on v5e/v6e/v7x, < physical on all
VMEM_TARGET_BYTES = 24 * 1024 * 1024  # per-grid-step working-set target


def _round_up(x, m):
    return (x + m - 1) // m * m


# ----------------------------------------------------------------------------
# Pallas kernel: fused multi-layer MLP  x @ W0 + b0 -> ReLU -> ... -> Wn + bn
# ----------------------------------------------------------------------------
def _mlp_stack_kernel(x_ref, *refs, n_layers, n_out):
    o_ref = refs[-1]
    wb = refs[:-1]                      # (w0, b0, w1, b1, ...), VMEM-resident
    h = x_ref[...]                      # (TM, K0) f32, unpadded feature width
    for i in range(n_layers):
        w = wb[2 * i][...]              # (Ki, Nip)  bf16 (or f32)
        b = wb[2 * i + 1][...]          # (1,  Nip)  f32
        y = jnp.dot(h.astype(w.dtype), w,
                    preferred_element_type=jnp.float32)    # MXU, f32 accumulate
        y = y + b                                           # f32 epilogue
        if i < n_layers - 1:
            y = jnp.maximum(y, 0.0)                         # fused ReLU
        h = y
    # Store only the true class columns: the HBM writeback is exactly
    # m * n_out * 4 bytes and no post-kernel slice pass is needed.
    o_ref[...] = h[:, :n_out].astype(o_ref.dtype)


# ----------------------------------------------------------------------------
# Parameter prep: fold BN into W/b, lane-pad N only, weights in matmul_dtype
# ----------------------------------------------------------------------------
def prepare_params(layer_params, eps=1e-5, matmul_dtype=jnp.bfloat16):
    prepped = []
    k_in = layer_params[0]["w"].shape[0]          # first layer: matches unpadded x
    for p in layer_params:
        k, n = p["w"].shape
        scale = p["gamma"] * jax.lax.rsqrt(p["var"] + eps)          # (1, K)
        w_fold = p["w"] * scale.T                                    # (K, N)
        b_fold = p["b"] + (p["beta"] - p["mean"] * scale) @ p["w"]   # (1, N)
        n_pad = _round_up(n, LANE)
        # Zero-fill padding: padded K rows contribute nothing, padded N columns
        # come out exactly zero (bias padding is zero, ReLU(0)=0).
        w_pad = jnp.zeros((k_in, n_pad), jnp.float32).at[:k, :n].set(w_fold)
        b_pad = jnp.zeros((1, n_pad), jnp.float32).at[:, :n].set(b_fold)
        prepped.append((w_pad.astype(matmul_dtype), b_pad))
        k_in = n_pad                              # next layer sees lane-padded width
    return prepped


# ----------------------------------------------------------------------------
# Tile-size heuristic: budget VMEM with the real layer widths
# ----------------------------------------------------------------------------
def _pick_tile_m(m, k0, n_pads, weight_bytes, vmem_budget=VMEM_TARGET_BYTES):
    lanes_in = _round_up(k0, LANE)        # VMEM rounds the lane dim up anyway
    lanes_out = n_pads[-1]
    # Per activation row resident in VMEM:
    #   2x double-buffered f32 x block + one bf16 cast copy,
    #   2x double-buffered f32 out block,
    #   per layer: one f32 result + one bf16 copy for the next matmul.
    per_row = (2 * 4 + 2) * lanes_in + 2 * 4 * lanes_out + 6 * sum(n_pads)
    per_row = per_row * 5 // 4            # 25% headroom for temporaries
    avail = vmem_budget - 2 * weight_bytes  # resident weights are double-buffered
    tm = max(8, min(avail // per_row, 8192))
    tm = (tm // 8) * 8                    # sublane-aligned tile
    tm = min(tm, max(8, (m // 8) * 8))    # don't exceed the data (ragged tail ok)
    # Keep >= 2 grid steps when there is enough work so ("parallel",) can split
    # the grid across v7x's two TensorCores.
    if m >= 4096:
        tm = min(tm, _round_up(pl.cdiv(m, 2), 8))
    return max(tm, 8)


# ----------------------------------------------------------------------------
# Fused stack over a flattened (M, K0) activation slab (no M / K padding)
# ----------------------------------------------------------------------------
def fused_mlp(x2d, prepped, n_out):
    m, k0 = x2d.shape
    n_layers = len(prepped)
    n_pads = [w.shape[1] for w, _ in prepped]
    weight_bytes = sum(int(w.size) * w.dtype.itemsize + int(b.size) * 4
                       for w, b in prepped)

    tm = _pick_tile_m(m, k0, n_pads, weight_bytes)
    grid = (pl.cdiv(m, tm),)              # ragged last tile; OOB writes clipped

    in_specs = [pl.BlockSpec((tm, k0), lambda i: (i, 0))]   # unpadded K stream
    flat_wb = []
    for w, b in prepped:
        flat_wb += [w, b]
        in_specs += [pl.BlockSpec(w.shape, lambda i: (0, 0)),   # VMEM-resident
                     pl.BlockSpec(b.shape, lambda i: (0, 0))]   # VMEM-resident

    flops = sum(2 * m * w.shape[0] * w.shape[1] for w, _ in prepped)
    bytes_accessed = m * k0 * 4 + m * n_out * 4 + weight_bytes

    kern = functools.partial(_mlp_stack_kernel, n_layers=n_layers, n_out=n_out)
    return pl.pallas_call(
        kern,
        out_shape=jax.ShapeDtypeStruct((m, n_out), jnp.float32),
        grid=grid,
        in_specs=in_specs,
        out_specs=pl.BlockSpec((tm, n_out), lambda i: (i, 0)),
        compiler_params=pltpu.CompilerParams(
            dimension_semantics=("parallel",),
            vmem_limit_bytes=VMEM_LIMIT_BYTES),
        cost_estimate=pl.CostEstimate(flops=int(flops), transcendentals=0,
                                      bytes_accessed=int(bytes_accessed)),
    )(x2d, *flat_wb)


# ----------------------------------------------------------------------------
# POSClassifier forward
# ----------------------------------------------------------------------------
def pos_classifier_forward(inp, layer_params, eps=1e-5,
                           matmul_dtype=jnp.bfloat16):
    raw_outputs, outputs = inp
    x = outputs[-1]                               # (sl, bs, K0)
    sl, bs, k0 = x.shape
    n_layers = len(layer_params)
    n_last = layer_params[-1]["w"].shape[1]

    prepped = prepare_params(layer_params, eps, matmul_dtype)
    y2d = fused_mlp(x.reshape(sl * bs, k0), prepped, n_last)  # (sl*bs, n_last)

    l_x = y2d.reshape(sl, bs, n_last)             # free (contiguous) reshape
    # Each LinearBlockSentence swaps the leading (seq, batch) axes; the ops are
    # row-wise over the flattened M, so only the final layout needs the swap.
    if n_layers % 2 == 1:
        l_x = jnp.transpose(l_x, (1, 0, 2))
    return l_x, raw_outputs, outputs


# ----------------------------------------------------------------------------
# Deterministic synthetic parameters (torch-layout: BN stats + Linear W/b)
# ----------------------------------------------------------------------------
def init_params(key, layers):
    params = []
    for i in range(len(layers) - 1):
        ni, nf = layers[i], layers[i + 1]
        key, k1, k2, k3, k4, k5, k6 = jax.random.split(key, 7)
        params.append(dict(
            gamma=1.0 + 0.1 * jax.random.normal(k1, (1, ni), jnp.float32),
            beta=0.1 * jax.random.normal(k2, (1, ni), jnp.float32),
            mean=0.1 * jax.random.normal(k3, (1, ni), jnp.float32),
            var=1.0 + 0.1 * jax.random.uniform(k4, (1, ni), dtype=jnp.float32),
            w=jax.random.normal(k5, (ni, nf), jnp.float32) / jnp.sqrt(ni),
            b=0.01 * jax.random.normal(k6, (1, nf), jnp.float32),
        ))
    return params


# ----------------------------------------------------------------------------
# Pure-JAX references
# ----------------------------------------------------------------------------
def reference_forward(inp, layer_params, eps=1e-5):
    """f32 reference mirroring the torch semantics (BN eval + Linear + permutes)."""
    _, outputs = inp
    x = outputs[-1]
    l_x = x
    for p in layer_params:
        xn = (x - p["mean"]) * jax.lax.rsqrt(p["var"] + eps) * p["gamma"] + p["beta"]
        y = jnp.einsum("abk,kn->abn", xn, p["w"],
                       precision=jax.lax.Precision.HIGHEST) + p["b"]
        l_x = jnp.transpose(y, (1, 0, 2))
        x = jnp.maximum(l_x, 0.0)
    return l_x


def emulated_stack(x2d, prepped, n_out):
    """Exact emulation of the kernel math (folded weights, f32 accumulation)."""
    h = x2d.astype(jnp.float32)
    for i, (w, b) in enumerate(prepped):
        y = jnp.dot(h.astype(w.dtype), w, preferred_element_type=jnp.float32) + b
        if i < len(prepped) - 1:
            y = jnp.maximum(y, 0.0)
        h = y
    return h[:, :n_out]


if __name__ == "__main__":
    key = jax.random.PRNGKey(0)
    kp, kx, kp2, kx2 = jax.random.split(key, 4)

    # ---- config A: 2 layers (even depth), M divides the tile exactly --------
    sl, bs = 8, 2
    layers = [32, 16, 8]                  # LinearBlockSentence(32->16), (16->8)
    params = init_params(kp, layers)
    last_output = jax.random.normal(kx, (sl, bs, layers[0]), jnp.float32)
    inp = ([last_output], [last_output])

    l_x, r_out, o_out = pos_classifier_forward(inp, params)
    l_x = jax.block_until_ready(l_x)
    assert l_x.shape == (sl, bs, layers[-1]), l_x.shape

    # Tight: kernel vs exact emulation of its own folded / bf16 math.
    prepped = prepare_params(params)
    y_emul = emulated_stack(last_output.reshape(sl * bs, layers[0]), prepped,
                            layers[-1]).reshape(sl, bs, layers[-1])
    assert jnp.allclose(l_x, y_emul, atol=1e-3, rtol=1e-3), "A: mismatch vs emulation"

    # Loose: bf16 matmul operands vs full-f32 torch-semantics reference.
    l_x_ref = reference_forward(inp, params)
    assert jnp.allclose(l_x, l_x_ref, atol=1e-1, rtol=1e-1), "A: mismatch vs f32 ref"

    # f32-weight mode (addresses the compounding-rounding concern): tighter match.
    l_x_f32, _, _ = pos_classifier_forward(inp, params, matmul_dtype=jnp.float32)
    l_x_f32 = jax.block_until_ready(l_x_f32)
    assert jnp.allclose(l_x_f32, l_x_ref, atol=3e-2, rtol=3e-2), "A: f32-mode mismatch"

    # ---- config B: 1 layer (odd depth -> (bs, sl, n) output), ragged M ------
    sl_b, bs_b = 9, 2                     # m = 18: exercises the ragged last tile
    layers_b = [32, 8]
    params_b = init_params(kp2, layers_b)
    x_b = jax.random.normal(kx2, (sl_b, bs_b, layers_b[0]), jnp.float32)
    inp_b = ([x_b], [x_b])

    l_x_b, _, _ = pos_classifier_forward(inp_b, params_b)
    l_x_b = jax.block_until_ready(l_x_b)
    assert l_x_b.shape == (bs_b, sl_b, layers_b[-1]), l_x_b.shape

    prepped_b = prepare_params(params_b)
    y_emul_b = emulated_stack(x_b.reshape(sl_b * bs_b, layers_b[0]), prepped_b,
                              layers_b[-1]).reshape(sl_b, bs_b, layers_b[-1])
    y_emul_b = jnp.transpose(y_emul_b, (1, 0, 2))
    assert jnp.allclose(l_x_b, y_emul_b, atol=1e-3, rtol=1e-3), "B: mismatch vs emulation"
    assert jnp.allclose(l_x_b, reference_forward(inp_b, params_b),
                        atol=1e-1, rtol=1e-1), "B: mismatch vs f32 ref"

    print("KERNEL_OK")
</pallas_src>

<mosaic_0001>
module attributes {stable_mosaic.version = 11 : i64} {
  func.func @_mlp_stack_kernel(%arg0: i32, %arg1: memref<16x32xf32, #tpu.memory_space<vmem>>, %arg2: memref<32x128xbf16, #tpu.memory_space<vmem>>, %arg3: memref<1x128xf32, #tpu.memory_space<vmem>>, %arg4: memref<128x128xbf16, #tpu.memory_space<vmem>>, %arg5: memref<1x128xf32, #tpu.memory_space<vmem>>, %arg6: memref<16x8xf32, #tpu.memory_space<vmem>>) attributes {dimension_semantics = [#tpu.dimension_semantics<parallel>], iteration_bounds = array<i64: 1>, scalar_prefetch = 0 : i64, scratch_operands = 0 : i64, tpu.core_type = #tpu.core_type<tc>, window_params = [{transform_indices = @transform_0, window_bounds = array<i64: 16, 32>}, {pipeline_mode = #tpu.pipeline_mode<synchronous>, transform_indices = @transform_1, window_bounds = array<i64: 32, 128>}, {pipeline_mode = #tpu.pipeline_mode<synchronous>, transform_indices = @transform_2, window_bounds = array<i64: 1, 128>}, {pipeline_mode = #tpu.pipeline_mode<synchronous>, transform_indices = @transform_3, window_bounds = array<i64: 128, 128>}, {pipeline_mode = #tpu.pipeline_mode<synchronous>, transform_indices = @transform_4, window_bounds = array<i64: 1, 128>}, {transform_indices = @transform_5, window_bounds = array<i64: 16, 8>}]} {
    %c0 = arith.constant 0 : index
    %c0_0 = arith.constant 0 : index
    %0 = vector.load %arg1[%c0, %c0_0] : memref<16x32xf32, #tpu.memory_space<vmem>>, vector<16x32xf32>
    %c0_1 = arith.constant 0 : index
    %c0_2 = arith.constant 0 : index
    %1 = vector.load %arg2[%c0_1, %c0_2] : memref<32x128xbf16, #tpu.memory_space<vmem>>, vector<32x128xbf16>
    %c0_3 = arith.constant 0 : index
    %c0_4 = arith.constant 0 : index
    %2 = vector.load %arg3[%c0_3, %c0_4] : memref<1x128xf32, #tpu.memory_space<vmem>>, vector<1x128xf32>
    %3 = arith.truncf %0 : vector<16x32xf32> to vector<16x32xbf16>
    %cst = arith.constant dense<0.000000e+00> : vector<16x128xf32>
    %4 = tpu.matmul %3, %1, %cst {dimension_numbers = #tpu.dot_dimension_numbers<[1], [0], [0], [1], [0, 0, 1, 1], [], []>} : vector<16x32xbf16>, vector<32x128xbf16>, vector<16x128xf32> -> vector<16x128xf32>
    %5 = vector.broadcast %2 : vector<1x128xf32> to vector<16x128xf32>
    %6 = arith.addf %4, %5 : vector<16x128xf32>
    %cst_5 = arith.constant 0.000000e+00 : f32
    %7 = vector.broadcast %cst_5 : f32 to vector<16x128xf32>
    %8 = arith.maximumf %6, %7 : vector<16x128xf32>
    %c0_6 = arith.constant 0 : index
    %c0_7 = arith.constant 0 : index
    %9 = vector.load %arg4[%c0_6, %c0_7] : memref<128x128xbf16, #tpu.memory_space<vmem>>, vector<128x128xbf16>
    %c0_8 = arith.constant 0 : index
    %c0_9 = arith.constant 0 : index
    %10 = vector.load %arg5[%c0_8, %c0_9] : memref<1x128xf32, #tpu.memory_space<vmem>>, vector<1x128xf32>
    %11 = arith.truncf %8 : vector<16x128xf32> to vector<16x128xbf16>
    %cst_10 = arith.constant dense<0.000000e+00> : vector<16x128xf32>
    %12 = tpu.matmul %11, %9, %cst_10 {dimension_numbers = #tpu.dot_dimension_numbers<[1], [0], [0], [1], [0, 0, 1, 1], [], []>} : vector<16x128xbf16>, vector<128x128xbf16>, vector<16x128xf32> -> vector<16x128xf32>
    %13 = vector.broadcast %10 : vector<1x128xf32> to vector<16x128xf32>
    %14 = arith.addf %12, %13 : vector<16x128xf32>
    %15 = vector.extract_strided_slice %14 {offsets = [0, 0], sizes = [16, 8], strides = [1, 1]} : vector<16x128xf32> to vector<16x8xf32>
    %c0_11 = arith.constant 0 : index
    %c0_12 = arith.constant 0 : index
    %16 = vector.load %arg6[%c0_11, %c0_12] : memref<16x8xf32, #tpu.memory_space<vmem>>, vector<16x8xf32>
    tpu.vector_store %arg6[%c0_11, %c0_12], %15 {strides = array<i32>} : memref<16x8xf32, #tpu.memory_space<vmem>>, vector<16x8xf32>,
    return
  }
  func.func @transform_0(%arg0: i32) -> (i32, i32) {
    %c0_i32 = arith.constant 0 : i32
    %c0_i32_0 = arith.constant 0 : i32
    return %arg0, %c0_i32 : i32, i32
  }
  func.func @transform_1(%arg0: i32) -> (i32, i32) {
    %c0_i32 = arith.constant 0 : i32
    %c0_i32_0 = arith.constant 0 : i32
    %c0_i32_1 = arith.constant 0 : i32
    return %c0_i32, %c0_i32_0 : i32, i32
  }
  func.func @transform_2(%arg0: i32) -> (i32, i32) {
    %c0_i32 = arith.constant 0 : i32
    %c0_i32_0 = arith.constant 0 : i32
    %c0_i32_1 = arith.constant 0 : i32
    return %c0_i32, %c0_i32_0 : i32, i32
  }
  func.func @transform_3(%arg0: i32) -> (i32, i32) {
    %c0_i32 = arith.constant 0 : i32
    %c0_i32_0 = arith.constant 0 : i32
    %c0_i32_1 = arith.constant 0 : i32
    return %c0_i32, %c0_i32_0 : i32, i32
  }
  func.func @transform_4(%arg0: i32) -> (i32, i32) {
    %c0_i32 = arith.constant 0 : i32
    %c0_i32_0 = arith.constant 0 : i32
    %c0_i32_1 = arith.constant 0 : i32
    return %c0_i32, %c0_i32_0 : i32, i32
  }
  func.func @transform_5(%arg0: i32) -> (i32, i32) {
    %c0_i32 = arith.constant 0 : i32
    %c0_i32_0 = arith.constant 0 : i32
    return %arg0, %c0_i32 : i32, i32
  }
}

</mosaic_0001>

<llo_original>
// kernel: tpu_custom_call.1
$region0: #{tpu_custom_call.1}
  #allocation0 [shape = 'u32[]', space=smem, size = 0x4, offset = 0x4, fixed_abs, tag = 'smem constant byte address 0x4 - core index']
  #allocation1 [shape = 'u32[144,128]{1,0:T(1,128)}', space=vmem, size = 0x12000, scoped, tag = 'internal scratch']
  %s0 = inlined_call_operand.hbm [shape: f32[16,32], index: 0, kind: input, shape index: {}]
  %s1 = inlined_call_operand.hbm [shape: bf16[32,128], index: 1, kind: input, shape index: {}]
  %s2 = inlined_call_operand.vmem [shape: f32[1,128], index: 2, kind: input, shape index: {}]
  %s3 = inlined_call_operand.hbm [shape: bf16[128,128], index: 3, kind: input, shape index: {}]
  %s4 = inlined_call_operand.vmem [shape: f32[1,128], index: 4, kind: input, shape index: {}]
  %s5 = inlined_call_operand.vmem [shape: f32[16,8], index: 5, kind: output, shape index: {}]
  %s6 = sld [smem:[#allocation0]]
  $region42: #{tpu_custom_call.1} parent=0
    _
  %s8 = ssub.s32 1, %s6
  %s9 = scalar_select 0, %s8, %s6
  $region1: #{tpu_custom_call.1} parent=0
    #allocation2 [shape = 'u8[8192]{0}', space=vmem, size = 0x2000, scoped, tag = 'input window, operand 0, single buffered']
    #allocation3 [shape = 's32[1]{0}', space=sflag, size = 0x4, scoped, tag = 'scoped memory for tpu_custom_call.1']
    #allocation4 [shape = 'u8[8192]{0}', space=vmem, size = 0x2000, scoped, tag = 'input window, operand 1, single buffered']
    #allocation5 [shape = 's32[1]{0}', space=sflag, size = 0x4, scoped, tag = 'scoped memory for tpu_custom_call.1']
    #allocation6 [shape = 'u8[32768]{0}', space=vmem, size = 0x8000, scoped, tag = 'input window, operand 3, single buffered']
    %10 = vsyncpa [#allocation3], 0
    %11 = vsyncpa [#allocation5], 0
    // Predicated region
    $region2: #{tpu_custom_call.1} parent=1 // pred_check
      _
    $region3: #{tpu_custom_call.1} parent=1 // pred_check_branch
      %13 = sbr.rel (0) target = $region5
    $region4: #{tpu_custom_call.1} parent=1 // pred_region
      %s15 = ssub.s32 256, 256
      %16 = vsyncadd [#allocation3], %s15
      %s17 = sshll.u32 [#allocation2], 4
      %s18 = int_to_ptr.vmem [resolvable:$true] %s17
      %23 = dma.hbm_to_vmem [thread:$0]  %s0, 256, %s18, [#allocation3], 128, 128, 8
    $region5: #{tpu_custom_call.1} parent=1 // pred_fallthru
      _
    // Predicated region
    $region6: #{tpu_custom_call.1} parent=1 // pred_check
      _
    $region7: #{tpu_custom_call.1} parent=1 // pred_check_branch
      %25 = sbr.rel (0) target = $region9
    $region8: #{tpu_custom_call.1} parent=1 // pred_region
      %s27 = ssub.s32 256, 256
      %28 = vsyncadd [#allocation5], %s27
      %s29 = sshll.u32 [#allocation4], 4
      %s30 = int_to_ptr.vmem [resolvable:$true] %s29
      %35 = dma.hbm_to_vmem [thread:$0]  %s1, 256, %s30, [#allocation5], 64, 64, 4
    $region9: #{tpu_custom_call.1} parent=1 // pred_fallthru
      _
    // Predicated region
    $region10: #{tpu_custom_call.1} parent=1 // pred_check
      _
    $region11: #{tpu_custom_call.1} parent=1 // pred_check_branch
      %37 = sbr.rel (0) target = $region13
    $region12: #{tpu_custom_call.1} parent=1 // pred_region
      _
    $region13: #{tpu_custom_call.1} parent=1 // pred_fallthru
      _
    // Predicated region
    $region14: #{tpu_custom_call.1} parent=1 // pred_check
      _
    $region15: #{tpu_custom_call.1} parent=1 // pred_check_branch
      %39 = sbr.rel (0) target = $region17
    $region16: #{tpu_custom_call.1} parent=1 // pred_region
      %s41 = ssub.s32 1024, 1024
      %42 = vsyncadd [#allocation5], %s41
      %s43 = sshll.u32 [#allocation6], 4
      %s44 = int_to_ptr.vmem [resolvable:$true] %s43
      %49 = dma.hbm_to_vmem [thread:$0]  %s3, 1024, %s44, [#allocation5], 64, 64, 4
    $region17: #{tpu_custom_call.1} parent=1 // pred_fallthru
      _
    // Predicated region
    $region18: #{tpu_custom_call.1} parent=1 // pred_check
      _
    $region19: #{tpu_custom_call.1} parent=1 // pred_check_branch
      %51 = sbr.rel (0) target = $region21
    $region20: #{tpu_custom_call.1} parent=1 // pred_region
      _
    $region21: #{tpu_custom_call.1} parent=1 // pred_fallthru
      _
    // Predicated region
    $region22: #{tpu_custom_call.1} parent=1 // pred_check
      _
    $region23: #{tpu_custom_call.1} parent=1 // pred_check_branch
      %53 = sbr.rel (0) target = $region25
    $region24: #{tpu_custom_call.1} parent=1 // pred_region
      %54 = dma.done [#allocation3], 256
    $region25: #{tpu_custom_call.1} parent=1 // pred_fallthru
      _
    // Predicated region
    $region26: #{tpu_custom_call.1} parent=1 // pred_check
      _
    $region27: #{tpu_custom_call.1} parent=1 // pred_check_branch
      %56 = sbr.rel (0) target = $region29
    $region28: #{tpu_custom_call.1} parent=1 // pred_region
      %57 = dma.done [#allocation5], 256
    $region29: #{tpu_custom_call.1} parent=1 // pred_fallthru
      _
    // Predicated region
    $region30: #{tpu_custom_call.1} parent=1 // pred_check
      _
    $region31: #{tpu_custom_call.1} parent=1 // pred_check_branch
      %59 = sbr.rel (0) target = $region33
    $region32: #{tpu_custom_call.1} parent=1 // pred_region
      %60 = dma.done [#allocation5], 1024
    $region33: #{tpu_custom_call.1} parent=1 // pred_fallthru
      _
    %v62 = vld [vmem:[#allocation2] sm:$0xff]
    %v63 = vld [vmem:[#allocation2 + $0x8] sm:$0xff]
    %v64 = vld [vmem:[#allocation4] sm:$0xf]
    %v65 = vld [vmem:[#allocation4 + $0x4] sm:$0xf]
    %v66 = vld [vmem:[#allocation4 + $0x8] sm:$0xf]
    %v67 = vld [vmem:[#allocation4 + $0xc] sm:$0xf]
    %v68 = vld [vmem:[%s2] sm:$0x1]
    %v69 = vpack.c.bf16 %v63, %v62
    %v71 = vlaneseq
    %v72 = vshrl.u32 %v71, 7
    %v73 = vsub.s32 0, %v72
    %v74 = vrot.slane %v68, %v73
    %v80 = vunpack.c.l.b16 %v64
    %v81 = vunpack.c.l.b16 %v65
    %v82 = vunpack.c.l.b16 %v66
    %v83 = vunpack.c.l.b16 %v67
    %v84 = vpack.c.b16 %v81, %v80
    %v85 = vpack.c.b16 %v83, %v82
    %vm88 = vcmask 261120
    %v90 = vsel %vm88, %v69, 0
    %92 = vmatprep.subr.bf16.mxu0 0
    %93 = vmatpush1.bf16.msra.mxu0 %v84
    %94 = vmatprep.subr.bf16.mxu0 0
    %95 = vmatpush1.bf16.msra.mxu0 %v85
    %96 = vmatprep.subr.bf16.mxu0 0
    %97 = vmatpush1.bf16.msra.mxu0 0
    %98 = vmatprep.subr.bf16.mxu0 0
    %99 = vmatpush1.bf16.msra.mxu0 0
    %100 = vmatprep.subr.bf16.mxu0 0
    %101 = vmatpush1.bf16.msra.mxu0 0
    %102 = vmatprep.subr.bf16.mxu0 0
    %103 = vmatpush1.bf16.msra.mxu0 0
    %104 = vmatprep.subr.bf16.mxu0 0
    %105 = vmatpush1.bf16.msra.mxu0 0
    %106 = vmatprep.subr.bf16.mxu0 0
    %107 = vmatpush1.bf16.msra.mxu0 0
    %108 = vmatprep.subr.bf16.mxu0 0
    %109 = vmatpush1.bf16.msra.mxu0 0
    %110 = vmatprep.subr.bf16.mxu0 0
    %111 = vmatpush1.bf16.msra.mxu0 0
    %112 = vmatprep.subr.bf16.mxu0 0
    %113 = vmatpush1.bf16.msra.mxu0 0
    %114 = vmatprep.subr.bf16.mxu0 0
    %115 = vmatpush1.bf16.msra.mxu0 0
    %116 = vmatprep.subr.bf16.mxu0 0
    %117 = vmatpush1.bf16.msra.mxu0 0
    %118 = vmatprep.subr.bf16.mxu0 0
    %119 = vmatpush1.bf16.msra.mxu0 0
    %120 = vmatprep.subr.bf16.mxu0 0
    %121 = vmatpush1.bf16.msra.mxu0 0
    %122 = vmatprep.subr.bf16.mxu0 0
    %123 = vmatpush1.bf16.msra.mxu0 0
    %124 = vmatprep.mubr.bf16.mxu0 0
    %125 = vmatmul.mubr.bf16.gmra.mrb[0].mxu0 %v90
    %v126 = vpop.f32.mrb[0].mxu0
    %v127 = vadd.f32 %v74, %v126
    %v128 = vpop.f32.mrb[0].mxu0
    %v129 = vpop.f32.mrb[0].mxu0
    %v130 = vadd.f32 %v74, %v129
    %v131 = vpop.f32.mrb[0].mxu0
    %132 = vdwg.mxu0
    %v133 = vmax.f32 %v127, 0.0
    %v134 = vmax.f32 %v130, 0.0
    %v135 = vld [vmem:[#allocation6] sm:$0xf]
    %v136 = vld [vmem:[#allocation6 + $0x4] sm:$0xf]
    %v137 = vld [vmem:[#allocation6 + $0x8] sm:$0xf]
    %v138 = vld [vmem:[#allocation6 + $0xc] sm:$0xf]
    %v139 = vld [vmem:[#allocation6 + $0x10] sm:$0xf]
    %v140 = vld [vmem:[#allocation6 + $0x14] sm:$0xf]
    %v141 = vld [vmem:[#allocation6 + $0x18] sm:$0xf]
    %v142 = vld [vmem:[#allocation6 + $0x1c] sm:$0xf]
    %v143 = vld [vmem:[#allocation6 + $0x20] sm:$0xf]
    %v144 = vld [vmem:[#allocation6 + $0x24] sm:$0xf]
    %v145 = vld [vmem:[#allocation6 + $0x28] sm:$0xf]
    %v146 = vld [vmem:[#allocation6 + $0x2c] sm:$0xf]
    %v147 = vld [vmem:[#allocation6 + $0x30] sm:$0xf]
    %v148 = vld [vmem:[#allocation6 + $0x34] sm:$0xf]
    %v149 = vld [vmem:[#allocation6 + $0x38] sm:$0xf]
    %v150 = vld [vmem:[#allocation6 + $0x3c] sm:$0xf]
    %v151 = vld [vmem:[%s4] sm:$0x1]
    %v152 = vpack.c.bf16 %v134, %v133
    %v154 = vlaneseq
    %v155 = vshrl.u32 %v154, 7
    %v156 = vsub.s32 0, %v155
    %v157 = vrot.slane %v151, %v156
    %v175 = vunpack.c.l.b16 %v135
    %v176 = vunpack.c.l.b16 %v136
    %v177 = vunpack.c.l.b16 %v137
    %v178 = vunpack.c.l.b16 %v138
    %v179 = vunpack.c.l.b16 %v139
    %v180 = vunpack.c.l.b16 %v140
    %v181 = vunpack.c.l.b16 %v141
    %v182 = vunpack.c.l.b16 %v142
    %v183 = vunpack.c.l.b16 %v143
    %v184 = vunpack.c.l.b16 %v144
    %v185 = vunpack.c.l.b16 %v145
    %v186 = vunpack.c.l.b16 %v146
    %v187 = vunpack.c.l.b16 %v147
    %v188 = vunpack.c.l.b16 %v148
    %v189 = vunpack.c.l.b16 %v149
    %v190 = vunpack.c.l.b16 %v150
    %v191 = vpack.c.b16 %v176, %v175
    %v192 = vpack.c.b16 %v178, %v177
    %v193 = vpack.c.b16 %v180, %v179
    %v194 = vpack.c.b16 %v182, %v181
    %v195 = vpack.c.b16 %v184, %v183
    %v196 = vpack.c.b16 %v186, %v185
    %v197 = vpack.c.b16 %v188, %v187
    %v198 = vpack.c.b16 %v190, %v189
    %207 = vmatprep.subr.bf16.mxu0 0
    %208 = vmatpush1.bf16.msra.mxu0 %v191
    %209 = vmatprep.subr.bf16.mxu0 0
    %210 = vmatpush1.bf16.msra.mxu0 %v192
    %211 = vmatprep.subr.bf16.mxu0 0
    %212 = vmatpush1.bf16.msra.mxu0 %v193
    %213 = vmatprep.subr.bf16.mxu0 0
    %214 = vmatpush1.bf16.msra.mxu0 %v194
    %215 = vmatprep.subr.bf16.mxu0 0
    %216 = vmatpush1.bf16.msra.mxu0 %v195
    %217 = vmatprep.subr.bf16.mxu0 0
    %218 = vmatpush1.bf16.msra.mxu0 %v196
    %219 = vmatprep.subr.bf16.mxu0 0
    %220 = vmatpush1.bf16.msra.mxu0 %v197
    %221 = vmatprep.subr.bf16.mxu0 0
    %222 = vmatpush1.bf16.msra.mxu0 %v198
    %223 = vmatprep.subr.bf16.mxu0 0
    %224 = vmatpush1.bf16.msra.mxu0 0
    %225 = vmatprep.subr.bf16.mxu0 0
    %226 = vmatpush1.bf16.msra.mxu0 0
    %227 = vmatprep.subr.bf16.mxu0 0
    %228 = vmatpush1.bf16.msra.mxu0 0
    %229 = vmatprep.subr.bf16.mxu0 0
    %230 = vmatpush1.bf16.msra.mxu0 0
    %231 = vmatprep.subr.bf16.mxu0 0
    %232 = vmatpush1.bf16.msra.mxu0 0
    %233 = vmatprep.subr.bf16.mxu0 0
    %234 = vmatpush1.bf16.msra.mxu0 0
    %235 = vmatprep.subr.bf16.mxu0 0
    %236 = vmatpush1.bf16.msra.mxu0 0
    %237 = vmatprep.subr.bf16.mxu0 0
    %238 = vmatpush1.bf16.msra.mxu0 0
    %239 = vmatprep.mubr.bf16.mxu0 0
    %240 = vmatmul.mubr.bf16.gmra.mrb[0].mxu0 %v152
    %v241 = vpop.f32.mrb[0].mxu0
    %v242 = vadd.f32 %v157, %v241
    %v243 = vpop.f32.mrb[0].mxu0
    %v244 = vpop.f32.mrb[0].mxu0
    %v245 = vadd.f32 %v157, %v244
    %v246 = vpop.f32.mrb[0].mxu0
    %247 = vdwg.mxu0
    %vm248 = vcmask 64512
    %249 = vst.msk [vmem:[%s5] sm:$0xff] %vm248, %v242
    %250 = vst.msk [vmem:[%s5 + $0x8] sm:$0xff] %vm248, %v245
    // Predicated region
    $region34: #{tpu_custom_call.1} parent=1 // pred_check
      _
    $region35: #{tpu_custom_call.1} parent=1 // pred_check_branch
      %252 = sbr.rel (0) target = $region37
    $region36: #{tpu_custom_call.1} parent=1 // pred_region
      _
    $region37: #{tpu_custom_call.1} parent=1 // pred_fallthru
      _
    // Predicated region
    $region38: #{tpu_custom_call.1} parent=1 // pred_check
      _
    $region39: #{tpu_custom_call.1} parent=1 // pred_check_branch
      %254 = sbr.rel (0) target = $region41
    $region40: #{tpu_custom_call.1} parent=1 // pred_region
      _
    $region41: #{tpu_custom_call.1} parent=1 // pred_fallthru
      _
    %255 = vsyncpa [#allocation3], 1
    %256 = vsyncpa [#allocation5], 1

</llo_original>
